<compile_context>
chip_gen: v7x
topology: tpu7x:2x2x1
jax: 0.10.0
libtpu: 0.0.40
codegen_flags: <defaults>
</compile_context>

<pallas_src>
import functools

import jax
import jax.numpy as jnp
from jax import lax
from jax.experimental import pallas as pl
from jax.experimental.pallas import tpu as pltpu


_VMEM_LIMIT_BYTES = 32 * 1024 * 1024   # raise v5e's 16 MiB scoped default; == v6e/v7x
_VMEM_BUDGET_BYTES = 24 * 1024 * 1024  # double-buffered working-set cap, v7x-safe


def _round_up(v, m):
    return ((v + m - 1) // m) * m


def _dot_dims(nt_layout):
    # nt_layout: W is (N, K)  -> contract last dims of both (x @ W.T on the MXU).
    # otherwise: W is (K, N)  -> standard (1, 0) contraction.
    return (((1,), (1,)), ((), ())) if nt_layout else (((1,), (0,)), ((), ()))


# --------------------------------------------------------------------------
# Path A: weight fully VMEM-resident, single K pass, no accumulator scratch.
# --------------------------------------------------------------------------
def _resident_w_kernel(x_ref, w_ref, o_ref, *, nt_layout, precision):
    o_ref[...] = lax.dot_general(
        x_ref[...],
        w_ref[...],
        dimension_numbers=_dot_dims(nt_layout),
        preferred_element_type=jnp.float32,
        precision=precision,
    ).astype(o_ref.dtype)


# --------------------------------------------------------------------------
# Path B: (M, N, K) tiled grid.
# --------------------------------------------------------------------------
def _tiled_kernel_inplace_f32(x_ref, w_ref, o_ref, *, nt_layout, precision):
    """f32 output: accumulate directly into the resident output block."""
    k = pl.program_id(2)
    part = lax.dot_general(
        x_ref[...],
        w_ref[...],
        dimension_numbers=_dot_dims(nt_layout),
        preferred_element_type=jnp.float32,
        precision=precision,
    )

    @pl.when(k == 0)
    def _():
        o_ref[...] = part

    @pl.when(k != 0)
    def _():
        o_ref[...] += part


def _tiled_kernel_acc(x_ref, w_ref, o_ref, acc_ref, *, nt_layout, precision):
    """Non-f32 output: keep an f32 accumulator scratch, cast once at the end."""
    k = pl.program_id(2)

    @pl.when(k == 0)
    def _():
        acc_ref[...] = jnp.zeros_like(acc_ref)

    acc_ref[...] += lax.dot_general(
        x_ref[...],
        w_ref[...],
        dimension_numbers=_dot_dims(nt_layout),
        preferred_element_type=jnp.float32,
        precision=precision,
    )

    @pl.when(k == pl.num_programs(2) - 1)
    def _():
        o_ref[...] = acc_ref[...].astype(o_ref.dtype)


@functools.partial(jax.jit, static_argnames=("weight_layout", "tm", "tn", "tk"))
def mapping_mat_forward(x, weight, *, weight_layout="nk", tm=None, tn=None, tk=None):
    """y = x @ W.T (bias-free linear, MappingMat.forward).

    x:      (B, condition_vec_dim)
    weight: (x_vec_dim, condition_vec_dim) if weight_layout == "nk" (PyTorch layout)
            (condition_vec_dim, x_vec_dim) if weight_layout == "kn" (pre-transposed)
    returns (B, x_vec_dim)
    """
    assert weight_layout in ("nk", "kn")
    nt = weight_layout == "nk"

    B, K = x.shape
    if nt:
        N, Kw = weight.shape
    else:
        Kw, N = weight.shape
    assert K == Kw, "condition_vec_dim mismatch"

    in_itemsize = jnp.dtype(x.dtype).itemsize
    out_dtype = x.dtype
    out_itemsize = jnp.dtype(out_dtype).itemsize
    precision = lax.Precision.HIGHEST if x.dtype == jnp.float32 else None

    # ---------------- Path A: weight fully VMEM-resident ----------------
    w_bytes = N * K * in_itemsize
    rem = _VMEM_BUDGET_BYTES - 2 * w_bytes           # 2x: BlockSpec double-buffers
    row_bytes = 2 * (K * in_itemsize + N * out_itemsize)
    tm_cap = rem // row_bytes if rem > 0 else 0
    use_resident = (2 * w_bytes <= (2 * _VMEM_BUDGET_BYTES) // 3) and tm_cap >= 8

    if use_resident and tn is None and tk is None:
        Mp8 = _round_up(B, 8)
        tm_a = 1024 if tm is None else tm
        tm_a = max(8, (min(tm_a, tm_cap, Mp8) // 8) * 8)
        # v7x megacore: if the whole batch is one "parallel" block, split it in two
        # so both TensorCores get work (only when there is enough batch to split).
        if Mp8 <= tm_a and Mp8 >= 16:
            tm_a = _round_up(Mp8 // 2, 8)
        Mp = _round_up(B, tm_a)
        x_p = x if Mp == B else jnp.pad(x, ((0, Mp - B), (0, 0)))

        w_block = (N, K) if nt else (K, N)
        kernel = functools.partial(
            _resident_w_kernel, nt_layout=nt, precision=precision)

        out_p = pl.pallas_call(
            kernel,
            out_shape=jax.ShapeDtypeStruct((Mp, N), out_dtype),
            grid=(Mp // tm_a,),
            in_specs=[
                pl.BlockSpec((tm_a, K), lambda i: (i, 0)),
                # Constant block index -> the weight is DMA'd exactly once.
                pl.BlockSpec(w_block, lambda i: (0, 0)),
            ],
            out_specs=pl.BlockSpec((tm_a, N), lambda i: (i, 0)),
            compiler_params=pltpu.CompilerParams(
                dimension_semantics=("parallel",),
                vmem_limit_bytes=_VMEM_LIMIT_BYTES,
            ),
            cost_estimate=pl.CostEstimate(
                flops=2 * Mp * N * K,
                transcendentals=0,
                bytes_accessed=in_itemsize * (Mp * K + N * K) + out_itemsize * Mp * N,
            ),
        )(x_p, weight)
        return out_p if Mp == B else out_p[:B]

    # ---------------- Path B: (M, N, K) tiled grid ----------------
    tm_b = 512 if tm is None else tm
    tn_b = 512 if tn is None else tn
    tk_b = 1024 if tk is None else tk

    tm_b = min(tm_b, _round_up(B, 8))
    tn_b = min(tn_b, _round_up(N, 128))   # lane-dense output tiles
    tk_b = min(tk_b, _round_up(K, 128))
    if tn_b >= 256:
        tn_b = (tn_b // 256) * 256        # v6e MXU is 2x(256x256)

    def _ws(tm_, tn_, tk_):
        acc = 0 if out_dtype == jnp.float32 else tm_ * tn_ * 4
        return (2 * in_itemsize * (tm_ * tk_ + tn_ * tk_)
                + 2 * out_itemsize * tm_ * tn_ + acc)

    # Shrink K first (accumulator RMW per K step is the expensive part), then N/M.
    while _ws(tm_b, tn_b, tk_b) > _VMEM_BUDGET_BYTES and tk_b > 256:
        tk_b //= 2
    while _ws(tm_b, tn_b, tk_b) > _VMEM_BUDGET_BYTES and tn_b > 256:
        tn_b //= 2
    while _ws(tm_b, tn_b, tk_b) > _VMEM_BUDGET_BYTES and tm_b > 256:
        tm_b //= 2
    tm_b = max(8, (tm_b // 8) * 8)
    tn_b = max(128, (tn_b // 128) * 128)
    tk_b = max(128, (tk_b // 128) * 128)

    Mp = _round_up(B, tm_b)
    Np = _round_up(N, tn_b)
    Kp = _round_up(K, tk_b)

    # Pad only when genuinely ragged (per-call W padding is extra HBM traffic).
    x_p = x if (Mp == B and Kp == K) else jnp.pad(x, ((0, Mp - B), (0, Kp - K)))
    if nt:
        w_p = weight if (Np == N and Kp == K) else jnp.pad(
            weight, ((0, Np - N), (0, Kp - K)))
        w_spec = pl.BlockSpec((tn_b, tk_b), lambda i, j, k: (j, k))
    else:
        w_p = weight if (Np == N and Kp == K) else jnp.pad(
            weight, ((0, Kp - K), (0, Np - N)))
        w_spec = pl.BlockSpec((tk_b, tn_b), lambda i, j, k: (k, j))

    if out_dtype == jnp.float32:
        kernel = functools.partial(
            _tiled_kernel_inplace_f32, nt_layout=nt, precision=precision)
        scratch = []
    else:
        kernel = functools.partial(
            _tiled_kernel_acc, nt_layout=nt, precision=precision)
        scratch = [pltpu.VMEM((tm_b, tn_b), jnp.float32)]

    grid = (Mp // tm_b, Np // tn_b, Kp // tk_b)
    bytes_accessed = (in_itemsize * ((Np // tn_b) * Mp * Kp      # x re-read per N tile
                                     + (Mp // tm_b) * Np * Kp)   # W re-read per M tile
                      + out_itemsize * Mp * Np)

    out_p = pl.pallas_call(
        kernel,
        out_shape=jax.ShapeDtypeStruct((Mp, Np), out_dtype),
        grid=grid,
        in_specs=[pl.BlockSpec((tm_b, tk_b), lambda i, j, k: (i, k)), w_spec],
        out_specs=pl.BlockSpec((tm_b, tn_b), lambda i, j, k: (i, j)),
        scratch_shapes=scratch,
        compiler_params=pltpu.CompilerParams(
            dimension_semantics=("parallel", "parallel", "arbitrary"),
            vmem_limit_bytes=_VMEM_LIMIT_BYTES,
        ),
        cost_estimate=pl.CostEstimate(
            flops=2 * Mp * Np * Kp,
            transcendentals=0,
            bytes_accessed=bytes_accessed,
        ),
    )(x_p, w_p)

    return out_p[:B, :N]


if __name__ == "__main__":
    key = jax.random.PRNGKey(0)
    kx, kw, kx2, kw2, kx3, kw3 = jax.random.split(key, 6)

    # --- Shipped (toy) config: condition_vec_dim=32, x_vec_dim=64, batch=8 ---
    batch, condition_vec_dim, x_vec_dim = 8, 32, 64
    x = jax.random.normal(kx, (batch, condition_vec_dim), dtype=jnp.float32)
    bound = 1.0 / (condition_vec_dim ** 0.5)
    weight = jax.random.uniform(
        kw, (x_vec_dim, condition_vec_dim), dtype=jnp.float32,
        minval=-bound, maxval=bound,
    )
    y = jax.block_until_ready(mapping_mat_forward(x, weight))
    y_ref = x @ weight.T
    assert y.shape == (batch, x_vec_dim)
    assert jnp.allclose(y, y_ref, atol=1e-5, rtol=1e-5)

    # --- Ragged shape forced onto the tiled (M, N, K) path with edge padding ---
    B2, K2, N2 = 300, 384, 320
    x2 = jax.random.normal(kx2, (B2, K2), dtype=jnp.float32)
    w2 = jax.random.normal(kw2, (N2, K2), dtype=jnp.float32) * 0.02
    y2 = jax.block_until_ready(mapping_mat_forward(x2, w2, tm=128, tn=128, tk=128))
    y2_ref = x2 @ w2.T
    assert y2.shape == (B2, N2)
    assert jnp.allclose(y2, y2_ref, atol=1e-3, rtol=1e-3)

    # --- Larger batch on the weight-resident path (single W DMA, 2-way M split) ---
    B3, K3, N3 = 256, 768, 512
    x3 = jax.random.normal(kx3, (B3, K3), dtype=jnp.float32)
    w3 = jax.random.normal(kw3, (N3, K3), dtype=jnp.float32) * 0.02
    y3 = jax.block_until_ready(mapping_mat_forward(x3, w3))
    y3_ref = x3 @ w3.T
    assert y3.shape == (B3, N3)
    assert jnp.allclose(y3, y3_ref, atol=1e-3, rtol=1e-3)

    print("KERNEL_OK")
</pallas_src>

<mosaic_0001>
module attributes {stable_mosaic.version = 11 : i64} {
  func.func @_resident_w_kernel(%arg0: i32, %arg1: memref<8x32xf32, #tpu.memory_space<vmem>>, %arg2: memref<64x32xf32, #tpu.memory_space<vmem>>, %arg3: memref<8x64xf32, #tpu.memory_space<vmem>>) attributes {dimension_semantics = [#tpu.dimension_semantics<parallel>], iteration_bounds = array<i64: 1>, scalar_prefetch = 0 : i64, scratch_operands = 0 : i64, tpu.core_type = #tpu.core_type<tc>, window_params = [{transform_indices = @transform_0, window_bounds = array<i64: 8, 32>}, {pipeline_mode = #tpu.pipeline_mode<synchronous>, transform_indices = @transform_1, window_bounds = array<i64: 64, 32>}, {transform_indices = @transform_2, window_bounds = array<i64: 8, 64>}]} {
    %c0 = arith.constant 0 : index
    %c0_0 = arith.constant 0 : index
    %0 = vector.load %arg1[%c0, %c0_0] : memref<8x32xf32, #tpu.memory_space<vmem>>, vector<8x32xf32>
    %c0_1 = arith.constant 0 : index
    %c0_2 = arith.constant 0 : index
    %1 = vector.load %arg2[%c0_1, %c0_2] : memref<64x32xf32, #tpu.memory_space<vmem>>, vector<64x32xf32>
    %cst = arith.constant dense<0.000000e+00> : vector<8x64xf32>
    %2 = tpu.matmul %0, %1, %cst {dimension_numbers = #tpu.dot_dimension_numbers<[1], [1], [0], [0], [0, 0, 1, 0], [], []>, precision = #tpu.contract_precision<fp32>} : vector<8x32xf32>, vector<64x32xf32>, vector<8x64xf32> -> vector<8x64xf32>
    %c0_3 = arith.constant 0 : index
    %c0_4 = arith.constant 0 : index
    %3 = vector.load %arg3[%c0_3, %c0_4] : memref<8x64xf32, #tpu.memory_space<vmem>>, vector<8x64xf32>
    tpu.vector_store %arg3[%c0_3, %c0_4], %2 {strides = array<i32>} : memref<8x64xf32, #tpu.memory_space<vmem>>, vector<8x64xf32>,
    return
  }
  func.func @transform_0(%arg0: i32) -> (i32, i32) {
    %c0_i32 = arith.constant 0 : i32
    %c0_i32_0 = arith.constant 0 : i32
    return %arg0, %c0_i32 : i32, i32
  }
  func.func @transform_1(%arg0: i32) -> (i32, i32) {
    %c0_i32 = arith.constant 0 : i32
    %c0_i32_0 = arith.constant 0 : i32
    %c0_i32_1 = arith.constant 0 : i32
    return %c0_i32, %c0_i32_0 : i32, i32
  }
  func.func @transform_2(%arg0: i32) -> (i32, i32) {
    %c0_i32 = arith.constant 0 : i32
    %c0_i32_0 = arith.constant 0 : i32
    return %arg0, %c0_i32 : i32, i32
  }
}

</mosaic_0001>

<llo_original>
// kernel: mapping_mat_forward.1
$region0: #{mapping_mat_forward.1}
  #allocation0 [shape = 'u32[]', space=smem, size = 0x4, offset = 0x4, fixed_abs, tag = 'smem constant byte address 0x4 - core index']
  #allocation1 [shape = 'u32[144,128]{1,0:T(1,128)}', space=vmem, size = 0x12000, scoped, tag = 'internal scratch']
  %s0 = inlined_call_operand.vmem [shape: f32[8,32], index: 0, kind: input, shape index: {}]
  %s1 = inlined_call_operand.vmem [shape: f32[64,32], index: 1, kind: input, shape index: {}]
  %s2 = inlined_call_operand.hbm [shape: f32[8,64], index: 2, kind: output, shape index: {}]
  %s3 = sld [smem:[#allocation0]]
  $region18: #{mapping_mat_forward.1} parent=0
    _
  %s5 = ssub.s32 1, %s3
  %s6 = scalar_select 0, %s5, %s3
  $region1: #{mapping_mat_forward.1} parent=0
    #allocation2 [shape = 'u8[4096]{0}', space=vmem, size = 0x1000, scoped, tag = 'output window, operand 0, single buffered']
    #allocation3 [shape = 's32[1]{0}', space=sflag, size = 0x4, scoped, tag = 'scoped memory for mapping_mat_forward.1']
    %7 = vsyncpa [#allocation3], 0
    // Predicated region
    $region2: #{mapping_mat_forward.1} parent=1 // pred_check
      _
    $region3: #{mapping_mat_forward.1} parent=1 // pred_check_branch
      %9 = sbr.rel (0) target = $region5
    $region4: #{mapping_mat_forward.1} parent=1 // pred_region
      _
    $region5: #{mapping_mat_forward.1} parent=1 // pred_fallthru
      _
    // Predicated region
    $region6: #{mapping_mat_forward.1} parent=1 // pred_check
      _
    $region7: #{mapping_mat_forward.1} parent=1 // pred_check_branch
      %11 = sbr.rel (0) target = $region9
    $region8: #{mapping_mat_forward.1} parent=1 // pred_region
      _
    $region9: #{mapping_mat_forward.1} parent=1 // pred_fallthru
      _
    %v12 = vld [vmem:[%s0] sm:$0xff]
    %v13 = vld [vmem:[%s1] sm:$0xff]
    %v14 = vld [vmem:[%s1 + $0x8] sm:$0xff]
    %v15 = vld [vmem:[%s1 + $0x10] sm:$0xff]
    %v16 = vld [vmem:[%s1 + $0x18] sm:$0xff]
    %v17 = vld [vmem:[%s1 + $0x20] sm:$0xff]
    %v18 = vld [vmem:[%s1 + $0x28] sm:$0xff]
    %v19 = vld [vmem:[%s1 + $0x30] sm:$0xff]
    %v20 = vld [vmem:[%s1 + $0x38] sm:$0xff]
    %vm21 = vcmask 261120
    %v23 = vsel %vm21, %v12, 0
    %v26 = vsel %vm21, %v13, 0
    %v29 = vsel %vm21, %v14, 0
    %v32 = vsel %vm21, %v15, 0
    %v35 = vsel %vm21, %v16, 0
    %v38 = vsel %vm21, %v17, 0
    %v41 = vsel %vm21, %v18, 0
    %v44 = vsel %vm21, %v19, 0
    %v47 = vsel %vm21, %v20, 0
    %49 = vmatprep.subr.mxu0 0.0
    %v50 = vand.u32 %v26, 4294901760
    %51 = vmatpush1.xpose.msra.mxu0 %v50
    %52 = vmatprep.subr.mxu0 0.0
    %v53 = vand.u32 %v29, 4294901760
    %54 = vmatpush1.xpose.msra.mxu0 %v53
    %55 = vmatprep.subr.mxu0 0.0
    %v56 = vand.u32 %v32, 4294901760
    %57 = vmatpush1.xpose.msra.mxu0 %v56
    %58 = vmatprep.subr.mxu0 0.0
    %v59 = vand.u32 %v35, 4294901760
    %60 = vmatpush1.xpose.msra.mxu0 %v59
    %61 = vmatprep.subr.mxu0 0.0
    %v62 = vand.u32 %v38, 4294901760
    %63 = vmatpush1.xpose.msra.mxu0 %v62
    %64 = vmatprep.subr.mxu0 0.0
    %v65 = vand.u32 %v41, 4294901760
    %66 = vmatpush1.xpose.msra.mxu0 %v65
    %67 = vmatprep.subr.mxu0 0.0
    %v68 = vand.u32 %v44, 4294901760
    %69 = vmatpush1.xpose.msra.mxu0 %v68
    %70 = vmatprep.subr.mxu0 0.0
    %v71 = vand.u32 %v47, 4294901760
    %72 = vmatpush1.xpose.msra.mxu0 %v71
    %73 = vmatprep.subr.mxu0 0.0
    %74 = vmatpush1.xpose.msra.mxu0 0.0
    %75 = vmatprep.subr.mxu0 0.0
    %76 = vmatpush1.xpose.msra.mxu0 0.0
    %77 = vmatprep.subr.mxu0 0.0
    %78 = vmatpush1.xpose.msra.mxu0 0.0
    %79 = vmatprep.subr.mxu0 0.0
    %80 = vmatpush1.xpose.msra.mxu0 0.0
    %81 = vmatprep.subr.mxu0 0.0
    %82 = vmatpush1.xpose.msra.mxu0 0.0
    %83 = vmatprep.subr.mxu0 0.0
    %84 = vmatpush1.xpose.msra.mxu0 0.0
    %85 = vmatprep.subr.mxu0 0.0
    %86 = vmatpush1.xpose.msra.mxu0 0.0
    %87 = vmatprep.subr.mxu0 0.0
    %88 = vmatpush1.xpose.msra.mxu0 0.0
    %89 = vmatprep.subr.mxu0 0.0
    %90 = vmatpush1.xpose.msra.mxu0 0.0
    %91 = vmatprep.subr.mxu0 0.0
    %92 = vmatpush1.xpose.msra.mxu0 0.0
    %93 = vmatprep.subr.mxu0 0.0
    %94 = vmatpush1.xpose.msra.mxu0 0.0
    %95 = vmatprep.subr.mxu0 0.0
    %96 = vmatpush1.xpose.msra.mxu0 0.0
    %97 = vmatprep.subr.mxu0 0.0
    %98 = vmatpush1.xpose.msra.mxu0 0.0
    %99 = vmatprep.subr.mxu0 0.0
    %100 = vmatpush1.xpose.msra.mxu0 0.0
    %101 = vmatprep.subr.mxu0 0.0
    %102 = vmatpush1.xpose.msra.mxu0 0.0
    %103 = vmatprep.subr.mxu0 0.0
    %104 = vmatpush1.xpose.msra.mxu0 0.0
    %105 = vmatprep.subr.mxu0 0.0
    %106 = vmatpush1.xpose.msra.mxu0 0.0
    %107 = vmatprep.subr.mxu0 0.0
    %108 = vmatpush1.xpose.msra.mxu0 0.0
    %109 = vmatprep.subr.mxu0 0.0
    %110 = vmatpush1.xpose.msra.mxu0 0.0
    %111 = vmatprep.subr.mxu0 0.0
    %112 = vmatpush1.xpose.msra.mxu0 0.0
    %113 = vmatprep.subr.mxu0 0.0
    %114 = vmatpush1.xpose.msra.mxu0 0.0
    %115 = vmatprep.subr.mxu0 0.0
    %116 = vmatpush1.xpose.msra.mxu0 0.0
    %117 = vmatprep.subr.mxu0 0.0
    %118 = vmatpush1.xpose.msra.mxu0 0.0
    %119 = vmatprep.subr.mxu0 0.0
    %120 = vmatpush1.xpose.msra.mxu0 0.0
    %121 = vmatprep.mubr.f32.mxu0 0.0
    %v122 = vand.u32 %v23, 4294901760
    %v123 = vsub.f32 %v23, %v122
    %v124 = vand.u32 %v123, 4294901760
    %v125 = vsub.f32 %v123, %v124
    %v126 = vand.u32 %v125, 4294901760
    %127 = vmatmul.mubr.f32.gmra.mrb[0].mxu0 %v126
    %v128 = vpop.f32.mrb[0].mxu0
    %v129 = vadd.f32 0.0, %v128
    %v130 = vpop.f32.mrb[0].mxu0
    %131 = vdwg.mxu0
    %132 = vmatprep.subr.mxu0 0.0
    %v133 = vand.u32 %v26, 4294901760
    %v134 = vsub.f32 %v26, %v133
    %v135 = vand.u32 %v134, 4294901760
    %v136 = vsub.f32 %v134, %v135
    %v137 = vand.u32 %v136, 4294901760
    %138 = vmatpush1.xpose.msra.mxu0 %v137
    %139 = vmatprep.subr.mxu0 0.0
    %v140 = vand.u32 %v29, 4294901760
    %v141 = vsub.f32 %v29, %v140
    %v142 = vand.u32 %v141, 4294901760
    %v143 = vsub.f32 %v141, %v142
    %v144 = vand.u32 %v143, 4294901760
    %145 = vmatpush1.xpose.msra.mxu0 %v144
    %146 = vmatprep.subr.mxu0 0.0
    %v147 = vand.u32 %v32, 4294901760
    %v148 = vsub.f32 %v32, %v147
    %v149 = vand.u32 %v148, 4294901760
    %v150 = vsub.f32 %v148, %v149
    %v151 = vand.u32 %v150, 4294901760
    %152 = vmatpush1.xpose.msra.mxu0 %v151
    %153 = vmatprep.subr.mxu0 0.0
    %v154 = vand.u32 %v35, 4294901760
    %v155 = vsub.f32 %v35, %v154
    %v156 = vand.u32 %v155, 4294901760
    %v157 = vsub.f32 %v155, %v156
    %v158 = vand.u32 %v157, 4294901760
    %159 = vmatpush1.xpose.msra.mxu0 %v158
    %160 = vmatprep.subr.mxu0 0.0
    %v161 = vand.u32 %v38, 4294901760
    %v162 = vsub.f32 %v38, %v161
    %v163 = vand.u32 %v162, 4294901760
    %v164 = vsub.f32 %v162, %v163
    %v165 = vand.u32 %v164, 4294901760
    %166 = vmatpush1.xpose.msra.mxu0 %v165
    %167 = vmatprep.subr.mxu0 0.0
    %v168 = vand.u32 %v41, 4294901760
    %v169 = vsub.f32 %v41, %v168
    %v170 = vand.u32 %v169, 4294901760
    %v171 = vsub.f32 %v169, %v170
    %v172 = vand.u32 %v171, 4294901760
    %173 = vmatpush1.xpose.msra.mxu0 %v172
    %174 = vmatprep.subr.mxu0 0.0
    %v175 = vand.u32 %v44, 4294901760
    %v176 = vsub.f32 %v44, %v175
    %v177 = vand.u32 %v176, 4294901760
    %v178 = vsub.f32 %v176, %v177
    %v179 = vand.u32 %v178, 4294901760
    %180 = vmatpush1.xpose.msra.mxu0 %v179
    %181 = vmatprep.subr.mxu0 0.0
    %v182 = vand.u32 %v47, 4294901760
    %v183 = vsub.f32 %v47, %v182
    %v184 = vand.u32 %v183, 4294901760
    %v185 = vsub.f32 %v183, %v184
    %v186 = vand.u32 %v185, 4294901760
    %187 = vmatpush1.xpose.msra.mxu0 %v186
    %188 = vmatprep.subr.mxu0 0.0
    %189 = vmatpush1.xpose.msra.mxu0 0.0
    %190 = vmatprep.subr.mxu0 0.0
    %191 = vmatpush1.xpose.msra.mxu0 0.0
    %192 = vmatprep.subr.mxu0 0.0
    %193 = vmatpush1.xpose.msra.mxu0 0.0
    %194 = vmatprep.subr.mxu0 0.0
    %195 = vmatpush1.xpose.msra.mxu0 0.0
    %196 = vmatprep.subr.mxu0 0.0
    %197 = vmatpush1.xpose.msra.mxu0 0.0
    %198 = vmatprep.subr.mxu0 0.0
    %199 = vmatpush1.xpose.msra.mxu0 0.0
    %200 = vmatprep.subr.mxu0 0.0
    %201 = vmatpush1.xpose.msra.mxu0 0.0
    %202 = vmatprep.subr.mxu0 0.0
    %203 = vmatpush1.xpose.msra.mxu0 0.0
    %204 = vmatprep.subr.mxu0 0.0
    %205 = vmatpush1.xpose.msra.mxu0 0.0
    %206 = vmatprep.subr.mxu0 0.0
    %207 = vmatpush1.xpose.msra.mxu0 0.0
    %208 = vmatprep.subr.mxu0 0.0
    %209 = vmatpush1.xpose.msra.mxu0 0.0
    %210 = vmatprep.subr.mxu0 0.0
    %211 = vmatpush1.xpose.msra.mxu0 0.0
    %212 = vmatprep.subr.mxu0 0.0
    %213 = vmatpush1.xpose.msra.mxu0 0.0
    %214 = vmatprep.subr.mxu0 0.0
    %215 = vmatpush1.xpose.msra.mxu0 0.0
    %216 = vmatprep.subr.mxu0 0.0
    %217 = vmatpush1.xpose.msra.mxu0 0.0
    %218 = vmatprep.subr.mxu0 0.0
    %219 = vmatpush1.xpose.msra.mxu0 0.0
    %220 = vmatprep.subr.mxu0 0.0
    %221 = vmatpush1.xpose.msra.mxu0 0.0
    %222 = vmatprep.subr.mxu0 0.0
    %223 = vmatpush1.xpose.msra.mxu0 0.0
    %224 = vmatprep.subr.mxu0 0.0
    %225 = vmatpush1.xpose.msra.mxu0 0.0
    %226 = vmatprep.subr.mxu0 0.0
    %227 = vmatpush1.xpose.msra.mxu0 0.0
    %228 = vmatprep.subr.mxu0 0.0
    %229 = vmatpush1.xpose.msra.mxu0 0.0
    %230 = vmatprep.subr.mxu0 0.0
    %231 = vmatpush1.xpose.msra.mxu0 0.0
    %232 = vmatprep.subr.mxu0 0.0
    %233 = vmatpush1.xpose.msra.mxu0 0.0
    %234 = vmatprep.subr.mxu0 0.0
    %235 = vmatpush1.xpose.msra.mxu0 0.0
    %236 = vmatprep.mubr.f32.mxu0 0.0
    %v237 = vand.u32 %v23, 4294901760
    %238 = vmatmul.mubr.f32.gmra.mrb[0].mxu0 %v237
    %v239 = vpop.f32.mrb[0].mxu0
    %v240 = vadd.f32 %v129, %v239
    %v241 = vpop.f32.mrb[0].mxu0
    %242 = vdwg.mxu0
    %243 = vmatprep.subr.mxu0 0.0
    %v244 = vand.u32 %v26, 4294901760
    %v245 = vsub.f32 %v26, %v244
    %246 = vmatpush1.xpose.msra.mxu0 %v245
    %247 = vmatprep.subr.mxu0 0.0
    %v248 = vand.u32 %v29, 4294901760
    %v249 = vsub.f32 %v29, %v248
    %250 = vmatpush1.xpose.msra.mxu0 %v249
    %251 = vmatprep.subr.mxu0 0.0
    %v252 = vand.u32 %v32, 4294901760
    %v253 = vsub.f32 %v32, %v252
    %254 = vmatpush1.xpose.msra.mxu0 %v253
    %255 = vmatprep.subr.mxu0 0.0
    %v256 = vand.u32 %v35, 4294901760
    %v257 = vsub.f32 %v35, %v256
    %258 = vmatpush1.xpose.msra.mxu0 %v257
    %259 = vmatprep.subr.mxu0 0.0
    %v260 = vand.u32 %v38, 4294901760
    %v261 = vsub.f32 %v38, %v260
    %262 = vmatpush1.xpose.msra.mxu0 %v261
    %263 = vmatprep.subr.mxu0 0.0
    %v264 = vand.u32 %v41, 4294901760
    %v265 = vsub.f32 %v41, %v264
    %266 = vmatpush1.xpose.msra.mxu0 %v265
    %267 = vmatprep.subr.mxu0 0.0
    %v268 = vand.u32 %v44, 4294901760
    %v269 = vsub.f32 %v44, %v268
    %270 = vmatpush1.xpose.msra.mxu0 %v269
    %271 = vmatprep.subr.mxu0 0.0
    %v272 = vand.u32 %v47, 4294901760
    %v273 = vsub.f32 %v47, %v272
    %274 = vmatpush1.xpose.msra.mxu0 %v273
    %275 = vmatprep.subr.mxu0 0.0
    %276 = vmatpush1.xpose.msra.mxu0 0.0
    %277 = vmatprep.subr.mxu0 0.0
    %278 = vmatpush1.xpose.msra.mxu0 0.0
    %279 = vmatprep.subr.mxu0 0.0
    %280 = vmatpush1.xpose.msra.mxu0 0.0
    %281 = vmatprep.subr.mxu0 0.0
    %282 = vmatpush1.xpose.msra.mxu0 0.0
    %283 = vmatprep.subr.mxu0 0.0
    %284 = vmatpush1.xpose.msra.mxu0 0.0
    %285 = vmatprep.subr.mxu0 0.0
    %286 = vmatpush1.xpose.msra.mxu0 0.0
    %287 = vmatprep.subr.mxu0 0.0
    %288 = vmatpush1.xpose.msra.mxu0 0.0
    %289 = vmatprep.subr.mxu0 0.0
    %290 = vmatpush1.xpose.msra.mxu0 0.0
    %291 = vmatprep.subr.mxu0 0.0
    %292 = vmatpush1.xpose.msra.mxu0 0.0
    %293 = vmatprep.subr.mxu0 0.0
    %294 = vmatpush1.xpose.msra.mxu0 0.0
    %295 = vmatprep.subr.mxu0 0.0
    %296 = vmatpush1.xpose.msra.mxu0 0.0
    %297 = vmatprep.subr.mxu0 0.0
    %298 = vmatpush1.xpose.msra.mxu0 0.0
    %299 = vmatprep.subr.mxu0 0.0
    %300 = vmatpush1.xpose.msra.mxu0 0.0
    %301 = vmatprep.subr.mxu0 0.0
    %302 = vmatpush1.xpose.msra.mxu0 0.0
    %303 = vmatprep.subr.mxu0 0.0
    %304 = vmatpush1.xpose.msra.mxu0 0.0
    %305 = vmatprep.subr.mxu0 0.0
    %306 = vmatpush1.xpose.msra.mxu0 0.0
    %307 = vmatprep.subr.mxu0 0.0
    %308 = vmatpush1.xpose.msra.mxu0 0.0
    %309 = vmatprep.subr.mxu0 0.0
    %310 = vmatpush1.xpose.msra.mxu0 0.0
    %311 = vmatprep.subr.mxu0 0.0
    %312 = vmatpush1.xpose.msra.mxu0 0.0
    %313 = vmatprep.subr.mxu0 0.0
    %314 = vmatpush1.xpose.msra.mxu0 0.0
    %315 = vmatprep.subr.mxu0 0.0
    %316 = vmatpush1.xpose.msra.mxu0 0.0
    %317 = vmatprep.subr.mxu0 0.0
    %318 = vmatpush1.xpose.msra.mxu0 0.0
    %319 = vmatprep.subr.mxu0 0.0
    %320 = vmatpush1.xpose.msra.mxu0 0.0
    %321 = vmatprep.subr.mxu0 0.0
    %322 = vmatpush1.xpose.msra.mxu0 0.0
    %323 = vmatprep.mubr.f32.mxu0 0.0
    %v324 = vand.u32 %v23, 4294901760
    %v325 = vsub.f32 %v23, %v324
    %326 = vmatmul.mubr.f32.gmra.mrb[0].mxu0 %v325
    %v327 = vpop.f32.mrb[0].mxu0
    %v328 = vadd.f32 %v240, %v327
    %v329 = vpop.f32.mrb[0].mxu0
    %330 = vdwg.mxu0
    %331 = vmatprep.subr.mxu0 0.0
    %v332 = vand.u32 %v26, 4294901760
    %333 = vmatpush1.xpose.msra.mxu0 %v332
    %334 = vmatprep.subr.mxu0 0.0
    %v335 = vand.u32 %v29, 4294901760
    %336 = vmatpush1.xpose.msra.mxu0 %v335
    %337 = vmatprep.subr.mxu0 0.0
    %v338 = vand.u32 %v32, 4294901760
    %339 = vmatpush1.xpose.msra.mxu0 %v338
    %340 = vmatprep.subr.mxu0 0.0
    %v341 = vand.u32 %v35, 4294901760
    %342 = vmatpush1.xpose.msra.mxu0 %v341
    %343 = vmatprep.subr.mxu0 0.0
    %v344 = vand.u32 %v38, 4294901760
    %345 = vmatpush1.xpose.msra.mxu0 %v344
    %346 = vmatprep.subr.mxu0 0.0
    %v347 = vand.u32 %v41, 4294901760
    %348 = vmatpush1.xpose.msra.mxu0 %v347
    %349 = vmatprep.subr.mxu0 0.0
    %v350 = vand.u32 %v44, 4294901760
    %351 = vmatpush1.xpose.msra.mxu0 %v350
    %352 = vmatprep.subr.mxu0 0.0
    %v353 = vand.u32 %v47, 4294901760
    %354 = vmatpush1.xpose.msra.mxu0 %v353
    %355 = vmatprep.subr.mxu0 0.0
    %356 = vmatpush1.xpose.msra.mxu0 0.0
    %357 = vmatprep.subr.mxu0 0.0
    %358 = vmatpush1.xpose.msra.mxu0 0.0
    %359 = vmatprep.subr.mxu0 0.0
    %360 = vmatpush1.xpose.msra.mxu0 0.0
    %361 = vmatprep.subr.mxu0 0.0
    %362 = vmatpush1.xpose.msra.mxu0 0.0
    %363 = vmatprep.subr.mxu0 0.0
    %364 = vmatpush1.xpose.msra.mxu0 0.0
    %365 = vmatprep.subr.mxu0 0.0
    %366 = vmatpush1.xpose.msra.mxu0 0.0
    %367 = vmatprep.subr.mxu0 0.0
    %368 = vmatpush1.xpose.msra.mxu0 0.0
    %369 = vmatprep.subr.mxu0 0.0
    %370 = vmatpush1.xpose.msra.mxu0 0.0
    %371 = vmatprep.subr.mxu0 0.0
    %372 = vmatpush1.xpose.msra.mxu0 0.0
    %373 = vmatprep.subr.mxu0 0.0
    %374 = vmatpush1.xpose.msra.mxu0 0.0
    %375 = vmatprep.subr.mxu0 0.0
    %376 = vmatpush1.xpose.msra.mxu0 0.0
    %377 = vmatprep.subr.mxu0 0.0
    %378 = vmatpush1.xpose.msra.mxu0 0.0
    %379 = vmatprep.subr.mxu0 0.0
    %380 = vmatpush1.xpose.msra.mxu0 0.0
    %381 = vmatprep.subr.mxu0 0.0
    %382 = vmatpush1.xpose.msra.mxu0 0.0
    %383 = vmatprep.subr.mxu0 0.0
    %384 = vmatpush1.xpose.msra.mxu0 0.0
    %385 = vmatprep.subr.mxu0 0.0
    %386 = vmatpush1.xpose.msra.mxu0 0.0
    %387 = vmatprep.subr.mxu0 0.0
    %388 = vmatpush1.xpose.msra.mxu0 0.0
    %389 = vmatprep.subr.mxu0 0.0
    %390 = vmatpush1.xpose.msra.mxu0 0.0
    %391 = vmatprep.subr.mxu0 0.0
    %392 = vmatpush1.xpose.msra.mxu0 0.0
    %393 = vmatprep.subr.mxu0 0.0
    %394 = vmatpush1.xpose.msra.mxu0 0.0
    %395 = vmatprep.subr.mxu0 0.0
    %396 = vmatpush1.xpose.msra.mxu0 0.0
    %397 = vmatprep.subr.mxu0 0.0
    %398 = vmatpush1.xpose.msra.mxu0 0.0
    %399 = vmatprep.subr.mxu0 0.0
    %400 = vmatpush1.xpose.msra.mxu0 0.0
    %401 = vmatprep.subr.mxu0 0.0
    %402 = vmatpush1.xpose.msra.mxu0 0.0
    %403 = vmatprep.mubr.f32.mxu0 0.0
    %v404 = vand.u32 %v23, 4294901760
    %v405 = vsub.f32 %v23, %v404
    %v406 = vand.u32 %v405, 4294901760
    %407 = vmatmul.mubr.f32.gmra.mrb[0].mxu0 %v406
    %v408 = vpop.f32.mrb[0].mxu0
    %v409 = vadd.f32 %v328, %v408
    %v410 = vpop.f32.mrb[0].mxu0
    %411 = vdwg.mxu0
    %412 = vmatprep.subr.mxu0 0.0
    %v413 = vand.u32 %v26, 4294901760
    %v414 = vsub.f32 %v26, %v413
    %v415 = vand.u32 %v414, 4294901760
    %416 = vmatpush1.xpose.msra.mxu0 %v415
    %417 = vmatprep.subr.mxu0 0.0
    %v418 = vand.u32 %v29, 4294901760
    %v419 = vsub.f32 %v29, %v418
    %v420 = vand.u32 %v419, 4294901760
    %421 = vmatpush1.xpose.msra.mxu0 %v420
    %422 = vmatprep.subr.mxu0 0.0
    %v423 = vand.u32 %v32, 4294901760
    %v424 = vsub.f32 %v32, %v423
    %v425 = vand.u32 %v424, 4294901760
    %426 = vmatpush1.xpose.msra.mxu0 %v425
    %427 = vmatprep.subr.mxu0 0.0
    %v428 = vand.u32 %v35, 4294901760
    %v429 = vsub.f32 %v35, %v428
    %v430 = vand.u32 %v429, 4294901760
    %431 = vmatpush1.xpose.msra.mxu0 %v430
    %432 = vmatprep.subr.mxu0 0.0
    %v433 = vand.u32 %v38, 4294901760
    %v434 = vsub.f32 %v38, %v433
    %v435 = vand.u32 %v434, 4294901760
    %436 = vmatpush1.xpose.msra.mxu0 %v435
    %437 = vmatprep.subr.mxu0 0.0
    %v438 = vand.u32 %v41, 4294901760
    %v439 = vsub.f32 %v41, %v438
    %v440 = vand.u32 %v439, 4294901760
    %441 = vmatpush1.xpose.msra.mxu0 %v440
    %442 = vmatprep.subr.mxu0 0.0
    %v443 = vand.u32 %v44, 4294901760
    %v444 = vsub.f32 %v44, %v443
    %v445 = vand.u32 %v444, 4294901760
    %446 = vmatpush1.xpose.msra.mxu0 %v445
    %447 = vmatprep.subr.mxu0 0.0
    %v448 = vand.u32 %v47, 4294901760
    %v449 = vsub.f32 %v47, %v448
    %v450 = vand.u32 %v449, 4294901760
    %451 = vmatpush1.xpose.msra.mxu0 %v450
    %452 = vmatprep.subr.mxu0 0.0
    %453 = vmatpush1.xpose.msra.mxu0 0.0
    %454 = vmatprep.subr.mxu0 0.0
    %455 = vmatpush1.xpose.msra.mxu0 0.0
    %456 = vmatprep.subr.mxu0 0.0
    %457 = vmatpush1.xpose.msra.mxu0 0.0
    %458 = vmatprep.subr.mxu0 0.0
    %459 = vmatpush1.xpose.msra.mxu0 0.0
    %460 = vmatprep.subr.mxu0 0.0
    %461 = vmatpush1.xpose.msra.mxu0 0.0
    %462 = vmatprep.subr.mxu0 0.0
    %463 = vmatpush1.xpose.msra.mxu0 0.0
    %464 = vmatprep.subr.mxu0 0.0
    %465 = vmatpush1.xpose.msra.mxu0 0.0
    %466 = vmatprep.subr.mxu0 0.0
    %467 = vmatpush1.xpose.msra.mxu0 0.0
    %468 = vmatprep.subr.mxu0 0.0
    %469 = vmatpush1.xpose.msra.mxu0 0.0
    %470 = vmatprep.subr.mxu0 0.0
    %471 = vmatpush1.xpose.msra.mxu0 0.0
    %472 = vmatprep.subr.mxu0 0.0
    %473 = vmatpush1.xpose.msra.mxu0 0.0
    %474 = vmatprep.subr.mxu0 0.0
    %475 = vmatpush1.xpose.msra.mxu0 0.0
    %476 = vmatprep.subr.mxu0 0.0
    %477 = vmatpush1.xpose.msra.mxu0 0.0
    %478 = vmatprep.subr.mxu0 0.0
    %479 = vmatpush1.xpose.msra.mxu0 0.0
    %480 = vmatprep.subr.mxu0 0.0
    %481 = vmatpush1.xpose.msra.mxu0 0.0
    %482 = vmatprep.subr.mxu0 0.0
    %483 = vmatpush1.xpose.msra.mxu0 0.0
    %484 = vmatprep.subr.mxu0 0.0
    %485 = vmatpush1.xpose.msra.mxu0 0.0
    %486 = vmatprep.subr.mxu0 0.0
    %487 = vmatpush1.xpose.msra.mxu0 0.0
    %488 = vmatprep.subr.mxu0 0.0
    %489 = vmatpush1.xpose.msra.mxu0 0.0
    %490 = vmatprep.subr.mxu0 0.0
    %491 = vmatpush1.xpose.msra.mxu0 0.0
    %492 = vmatprep.subr.mxu0 0.0
    %493 = vmatpush1.xpose.msra.mxu0 0.0
    %494 = vmatprep.subr.mxu0 0.0
    %495 = vmatpush1.xpose.msra.mxu0 0.0
    %496 = vmatprep.subr.mxu0 0.0
    %497 = vmatpush1.xpose.msra.mxu0 0.0
    %498 = vmatprep.subr.mxu0 0.0
    %499 = vmatpush1.xpose.msra.mxu0 0.0
    %500 = vmatprep.mubr.f32.mxu0 0.0
    %v501 = vand.u32 %v23, 4294901760
    %502 = vmatmul.mubr.f32.gmra.mrb[0].mxu0 %v501
    %v503 = vpop.f32.mrb[0].mxu0
    %v504 = vadd.f32 %v409, %v503
    %v505 = vpop.f32.mrb[0].mxu0
    %506 = vdwg.mxu0
    %507 = vmatprep.subr.mxu0 0.0
    %v508 = vand.u32 %v26, 4294901760
    %509 = vmatpush1.xpose.msra.mxu0 %v508
    %510 = vmatprep.subr.mxu0 0.0
    %v511 = vand.u32 %v29, 4294901760
    %512 = vmatpush1.xpose.msra.mxu0 %v511
    %513 = vmatprep.subr.mxu0 0.0
    %v514 = vand.u32 %v32, 4294901760
    %515 = vmatpush1.xpose.msra.mxu0 %v514
    %516 = vmatprep.subr.mxu0 0.0
    %v517 = vand.u32 %v35, 4294901760
    %518 = vmatpush1.xpose.msra.mxu0 %v517
    %519 = vmatprep.subr.mxu0 0.0
    %v520 = vand.u32 %v38, 4294901760
    %521 = vmatpush1.xpose.msra.mxu0 %v520
    %522 = vmatprep.subr.mxu0 0.0
    %v523 = vand.u32 %v41, 4294901760
    %524 = vmatpush1.xpose.msra.mxu0 %v523
    %525 = vmatprep.subr.mxu0 0.0
    %v526 = vand.u32 %v44, 4294901760
    %527 = vmatpush1.xpose.msra.mxu0 %v526
    %528 = vmatprep.subr.mxu0 0.0
    %v529 = vand.u32 %v47, 4294901760
    %530 = vmatpush1.xpose.msra.mxu0 %v529
    %531 = vmatprep.subr.mxu0 0.0
    %532 = vmatpush1.xpose.msra.mxu0 0.0
    %533 = vmatprep.subr.mxu0 0.0
    %534 = vmatpush1.xpose.msra.mxu0 0.0
    %535 = vmatprep.subr.mxu0 0.0
    %536 = vmatpush1.xpose.msra.mxu0 0.0
    %537 = vmatprep.subr.mxu0 0.0
    %538 = vmatpush1.xpose.msra.mxu0 0.0
    %539 = vmatprep.subr.mxu0 0.0
    %540 = vmatpush1.xpose.msra.mxu0 0.0
    %541 = vmatprep.subr.mxu0 0.0
    %542 = vmatpush1.xpose.msra.mxu0 0.0
    %543 = vmatprep.subr.mxu0 0.0
    %544 = vmatpush1.xpose.msra.mxu0 0.0
    %545 = vmatprep.subr.mxu0 0.0
    %546 = vmatpush1.xpose.msra.mxu0 0.0
    %547 = vmatprep.subr.mxu0 0.0
    %548 = vmatpush1.xpose.msra.mxu0 0.0
    %549 = vmatprep.subr.mxu0 0.0
    %550 = vmatpush1.xpose.msra.mxu0 0.0
    %551 = vmatprep.subr.mxu0 0.0
    %552 = vmatpush1.xpose.msra.mxu0 0.0
    %553 = vmatprep.subr.mxu0 0.0
    %554 = vmatpush1.xpose.msra.mxu0 0.0
    %555 = vmatprep.subr.mxu0 0.0
    %556 = vmatpush1.xpose.msra.mxu0 0.0
    %557 = vmatprep.subr.mxu0 0.0
    %558 = vmatpush1.xpose.msra.mxu0 0.0
    %559 = vmatprep.subr.mxu0 0.0
    %560 = vmatpush1.xpose.msra.mxu0 0.0
    %561 = vmatprep.subr.mxu0 0.0
    %562 = vmatpush1.xpose.msra.mxu0 0.0
    %563 = vmatprep.subr.mxu0 0.0
    %564 = vmatpush1.xpose.msra.mxu0 0.0
    %565 = vmatprep.subr.mxu0 0.0
    %566 = vmatpush1.xpose.msra.mxu0 0.0
    %567 = vmatprep.subr.mxu0 0.0
    %568 = vmatpush1.xpose.msra.mxu0 0.0
    %569 = vmatprep.subr.mxu0 0.0
    %570 = vmatpush1.xpose.msra.mxu0 0.0
    %571 = vmatprep.subr.mxu0 0.0
    %572 = vmatpush1.xpose.msra.mxu0 0.0
    %573 = vmatprep.subr.mxu0 0.0
    %574 = vmatpush1.xpose.msra.mxu0 0.0
    %575 = vmatprep.subr.mxu0 0.0
    %576 = vmatpush1.xpose.msra.mxu0 0.0
    %577 = vmatprep.subr.mxu0 0.0
    %578 = vmatpush1.xpose.msra.mxu0 0.0
    %579 = vmatprep.mubr.f32.mxu0 0.0
    %v580 = vand.u32 %v23, 4294901760
    %581 = vmatmul.mubr.f32.gmra.mrb[0].mxu0 %v580
    %v582 = vpop.f32.mrb[0].mxu0
    %v583 = vadd.f32 %v504, %v582
    %v584 = vpop.f32.mrb[0].mxu0
    %585 = vdwg.mxu0
    %vm586 = vcmask 523264
    %587 = vst.msk [vmem:[#allocation2] sm:$0xff] %vm586, %v583
    // Predicated region
    $region10: #{mapping_mat_forward.1} parent=1 // pred_check
      _
    $region11: #{mapping_mat_forward.1} parent=1 // pred_check_branch
      %589 = sbr.rel (0) target = $region13
    $region12: #{mapping_mat_forward.1} parent=1 // pred_region
      %s591 = ssub.s32 128, 128
      %592 = vsyncadd [#allocation3], %s591
      %s594 = sshll.u32 [#allocation2], 4
      %s595 = int_to_ptr.vmem [resolvable:$true] %s594
      %597 = dma.vmem_to_hbm [thread:$0]  %s595, 128, %s2, [#allocation3]
    $region13: #{mapping_mat_forward.1} parent=1 // pred_fallthru
      _
    // Predicated region
    $region14: #{mapping_mat_forward.1} parent=1 // pred_check
      _
    $region15: #{mapping_mat_forward.1} parent=1 // pred_check_branch
      %599 = sbr.rel (0) target = $region17
    $region16: #{mapping_mat_forward.1} parent=1 // pred_region
      %600 = dma.done [#allocation3], 128
    $region17: #{mapping_mat_forward.1} parent=1 // pred_fallthru
      _
    %601 = vsyncpa [#allocation3], 1

</llo_original>
